<compile_context>
chip_gen: v7x
topology: tpu7x:2x2x1
jax: 0.10.0
libtpu: 0.0.40
codegen_flags: <defaults>
</compile_context>

<pallas_src>
import functools

import jax
import jax.numpy as jnp
from jax.experimental import pallas as pl
from jax.experimental.pallas import tpu as pltpu


def _continuous_reshape_kernel(x_ref, wb_ref, o_ref, *, emb: int, fold: int):
    # x_ref : (tm, fold)      -- `fold` consecutive flat rows packed on lanes
    # wb_ref: (2, emb)        -- row 0 = Linear weight (transposed), row 1 = bias
    # o_ref : (tm, fold*emb)  -- lane-dense output tile
    x = x_ref[...]
    w = wb_ref[0:1, :]          # (1, emb), loaded once (resident block)
    b = wb_ref[1:2, :]          # (1, emb)
    for j in range(fold):       # static unroll; fold is small
        # (tm, 1) * (1, emb) broadcast FMA on the VPU; store into the
        # j-th emb-wide lane group of the 128-lane-dense output tile.
        o_ref[:, j * emb:(j + 1) * emb] = x[:, j:j + 1] * w + b


def continuous_reshape(x, weight, bias, *, target_tile_bytes=2 * 1024 * 1024):
    """x: (B, S) float; weight: (E, 1); bias: (E,) -> (B, S, E)."""
    B, S = x.shape
    E = weight.shape[0]
    N = B * S
    dtype = x.dtype
    itemsize = jnp.dtype(dtype).itemsize

    # --- lane-density fold factor ---
    if E % 128 == 0:
        k = 1                       # already lane-dense
    elif 128 % E == 0:
        k = 128 // E                # fold k rows -> 128-lane output rows
    else:
        k = 1                       # fallback: correct, block last dim == full E
    ke = k * E

    # --- row tile (in folded rows): ~target_tile_bytes of output per step ---
    bytes_per_row = ke * itemsize
    target_rows = max(8, (target_tile_bytes // bytes_per_row) // 8 * 8)

    n_fold = pl.cdiv(N, k)
    if n_fold <= target_rows:
        tm = n_fold                 # single block == full extent (8-rule exempt)
        n_blocks = 1
    else:
        tm = target_rows            # multiple of 8 by construction
        n_blocks = pl.cdiv(n_fold, tm)
    n_fold_pad = n_blocks * tm
    n_pad = n_fold_pad * k

    # --- host-side layout prep (cheap, O(N + E)) ---
    x_flat = x.reshape(N)
    if n_pad != N:
        x_flat = jnp.pad(x_flat, (0, n_pad - N))
    x_fold = x_flat.reshape(n_fold_pad, k)

    w_row = weight.reshape(1, E).astype(dtype)
    b_row = bias.reshape(1, E).astype(dtype)
    wb = jnp.concatenate([w_row, b_row], axis=0)        # (2, E), single resident input

    kernel = functools.partial(_continuous_reshape_kernel, emb=E, fold=k)

    cost = pl.CostEstimate(
        flops=2 * N * E,
        transcendentals=0,
        bytes_accessed=N * itemsize + 2 * E * itemsize + N * E * itemsize,
    )

    out_fold = pl.pallas_call(
        kernel,
        out_shape=jax.ShapeDtypeStruct((n_fold_pad, ke), dtype),
        grid_spec=pltpu.PrefetchScalarGridSpec(
            num_scalar_prefetch=0,
            grid=(n_blocks,),
            in_specs=[
                pl.BlockSpec((tm, k), lambda i: (i, 0)),    # folded x rows
                pl.BlockSpec((2, E), lambda i: (0, 0)),     # weight+bias (resident)
            ],
            out_specs=pl.BlockSpec((tm, ke), lambda i: (i, 0)),
        ),
        compiler_params=pltpu.CompilerParams(
            dimension_semantics=("parallel",),              # shards across TCs on v7x
            vmem_limit_bytes=32 * 1024 * 1024,              # > v5e's 16 MiB default
        ),
        cost_estimate=cost,
    )(x_fold, wb)

    out = out_fold.reshape(n_pad, E)                        # free row-major reshape
    if n_pad != N:
        out = out[:N]
    return out.reshape(B, S, E)


if __name__ == "__main__":
    B, S, E = 2, 8, 32

    key = jax.random.PRNGKey(0)
    kx, kw, kb = jax.random.split(key, 3)

    # nn.Linear(1, E) parameter shapes: weight (E, 1), bias (E,)
    weight = jax.random.normal(kw, (E, 1), dtype=jnp.float32)
    bias = jax.random.normal(kb, (E,), dtype=jnp.float32)

    # Input (B, S) of continuous features
    x = jax.random.normal(kx, (B, S), dtype=jnp.float32)

    out = continuous_reshape(x, weight, bias)
    out = jax.block_until_ready(out)

    # Reference check (pure JAX)
    ref = x[:, :, None] * weight[:, 0][None, None, :] + bias[None, None, :]
    assert out.shape == (B, S, E)
    assert jnp.allclose(out, ref, atol=1e-6, rtol=1e-6)

    print("KERNEL_OK")
</pallas_src>

<mosaic_0001>
module attributes {stable_mosaic.version = 11 : i64} {
  func.func @_continuous_reshape_kernel(%arg0: i32, %arg1: memref<4x4xf32, #tpu.memory_space<vmem>>, %arg2: memref<2x32xf32, #tpu.memory_space<vmem>>, %arg3: memref<4x128xf32, #tpu.memory_space<vmem>>) attributes {dimension_semantics = [#tpu.dimension_semantics<parallel>], iteration_bounds = array<i64: 1>, scalar_prefetch = 0 : i64, scratch_operands = 0 : i64, tpu.core_type = #tpu.core_type<tc>, window_params = [{transform_indices = @transform_0, window_bounds = array<i64: 4, 4>}, {pipeline_mode = #tpu.pipeline_mode<synchronous>, transform_indices = @transform_1, window_bounds = array<i64: 2, 32>}, {transform_indices = @transform_2, window_bounds = array<i64: 4, 128>}]} {
    %c0 = arith.constant 0 : index
    %c0_0 = arith.constant 0 : index
    %0 = vector.load %arg1[%c0, %c0_0] : memref<4x4xf32, #tpu.memory_space<vmem>>, vector<4x4xf32>
    %c0_1 = arith.constant 0 : index
    %c0_2 = arith.constant 0 : index
    %1 = vector.load %arg2[%c0_1, %c0_2] : memref<2x32xf32, #tpu.memory_space<vmem>>, vector<1x32xf32>
    %c1 = arith.constant 1 : index
    %c0_3 = arith.constant 0 : index
    %2 = vector.load %arg2[%c1, %c0_3] : memref<2x32xf32, #tpu.memory_space<vmem>>, vector<1x32xf32>
    %3 = vector.extract_strided_slice %0 {offsets = [0, 0], sizes = [4, 1], strides = [1, 1]} : vector<4x4xf32> to vector<4x1xf32>
    %4 = vector.broadcast %3 : vector<4x1xf32> to vector<4x32xf32>
    %5 = vector.broadcast %1 : vector<1x32xf32> to vector<4x32xf32>
    %6 = arith.mulf %4, %5 : vector<4x32xf32>
    %7 = vector.broadcast %2 : vector<1x32xf32> to vector<4x32xf32>
    %8 = arith.addf %6, %7 : vector<4x32xf32>
    %c0_4 = arith.constant 0 : index
    %c0_5 = arith.constant 0 : index
    %9 = vector.load %arg3[%c0_4, %c0_5] : memref<4x128xf32, #tpu.memory_space<vmem>>, vector<4x32xf32>
    tpu.vector_store %arg3[%c0_4, %c0_5], %8 {strides = array<i32>} : memref<4x128xf32, #tpu.memory_space<vmem>>, vector<4x32xf32>,
    %10 = vector.extract_strided_slice %0 {offsets = [0, 1], sizes = [4, 1], strides = [1, 1]} : vector<4x4xf32> to vector<4x1xf32>
    %11 = vector.broadcast %10 : vector<4x1xf32> to vector<4x32xf32>
    %12 = vector.broadcast %1 : vector<1x32xf32> to vector<4x32xf32>
    %13 = arith.mulf %11, %12 : vector<4x32xf32>
    %14 = vector.broadcast %2 : vector<1x32xf32> to vector<4x32xf32>
    %15 = arith.addf %13, %14 : vector<4x32xf32>
    %c0_6 = arith.constant 0 : index
    %c32 = arith.constant 32 : index
    %16 = vector.load %arg3[%c0_6, %c32] : memref<4x128xf32, #tpu.memory_space<vmem>>, vector<4x32xf32>
    tpu.vector_store %arg3[%c0_6, %c32], %15 {strides = array<i32>} : memref<4x128xf32, #tpu.memory_space<vmem>>, vector<4x32xf32>,
    %17 = vector.extract_strided_slice %0 {offsets = [0, 2], sizes = [4, 1], strides = [1, 1]} : vector<4x4xf32> to vector<4x1xf32>
    %18 = vector.broadcast %17 : vector<4x1xf32> to vector<4x32xf32>
    %19 = vector.broadcast %1 : vector<1x32xf32> to vector<4x32xf32>
    %20 = arith.mulf %18, %19 : vector<4x32xf32>
    %21 = vector.broadcast %2 : vector<1x32xf32> to vector<4x32xf32>
    %22 = arith.addf %20, %21 : vector<4x32xf32>
    %c0_7 = arith.constant 0 : index
    %c64 = arith.constant 64 : index
    %23 = vector.load %arg3[%c0_7, %c64] : memref<4x128xf32, #tpu.memory_space<vmem>>, vector<4x32xf32>
    tpu.vector_store %arg3[%c0_7, %c64], %22 {strides = array<i32>} : memref<4x128xf32, #tpu.memory_space<vmem>>, vector<4x32xf32>,
    %24 = vector.extract_strided_slice %0 {offsets = [0, 3], sizes = [4, 1], strides = [1, 1]} : vector<4x4xf32> to vector<4x1xf32>
    %25 = vector.broadcast %24 : vector<4x1xf32> to vector<4x32xf32>
    %26 = vector.broadcast %1 : vector<1x32xf32> to vector<4x32xf32>
    %27 = arith.mulf %25, %26 : vector<4x32xf32>
    %28 = vector.broadcast %2 : vector<1x32xf32> to vector<4x32xf32>
    %29 = arith.addf %27, %28 : vector<4x32xf32>
    %c0_8 = arith.constant 0 : index
    %c96 = arith.constant 96 : index
    %30 = vector.load %arg3[%c0_8, %c96] : memref<4x128xf32, #tpu.memory_space<vmem>>, vector<4x32xf32>
    tpu.vector_store %arg3[%c0_8, %c96], %29 {strides = array<i32>} : memref<4x128xf32, #tpu.memory_space<vmem>>, vector<4x32xf32>,
    return
  }
  func.func @transform_0(%arg0: i32) -> (i32, i32) {
    %c0_i32 = arith.constant 0 : i32
    %c0_i32_0 = arith.constant 0 : i32
    return %arg0, %c0_i32 : i32, i32
  }
  func.func @transform_1(%arg0: i32) -> (i32, i32) {
    %c0_i32 = arith.constant 0 : i32
    %c0_i32_0 = arith.constant 0 : i32
    %c0_i32_1 = arith.constant 0 : i32
    return %c0_i32, %c0_i32_0 : i32, i32
  }
  func.func @transform_2(%arg0: i32) -> (i32, i32) {
    %c0_i32 = arith.constant 0 : i32
    %c0_i32_0 = arith.constant 0 : i32
    return %arg0, %c0_i32 : i32, i32
  }
}

</mosaic_0001>

<llo_original>
// kernel: tpu_custom_call.1
$region0: #{tpu_custom_call.1}
  #allocation0 [shape = 'u32[]', space=smem, size = 0x4, offset = 0x4, fixed_abs, tag = 'smem constant byte address 0x4 - core index']
  #allocation1 [shape = 'u32[144,128]{1,0:T(1,128)}', space=vmem, size = 0x12000, scoped, tag = 'internal scratch']
  %s0 = inlined_call_operand.hbm [shape: f32[4,4], index: 0, kind: input, shape index: {}]
  %s1 = inlined_call_operand.vmem [shape: f32[2,32], index: 1, kind: input, shape index: {}]
  %s2 = inlined_call_operand.hbm [shape: f32[4,128], index: 2, kind: output, shape index: {}]
  %s3 = sld [smem:[#allocation0]]
  $region22: #{tpu_custom_call.1} parent=0
    _
  %s5 = ssub.s32 1, %s3
  %s6 = scalar_select 0, %s5, %s3
  $region1: #{tpu_custom_call.1} parent=0
    #allocation2 [shape = 'u8[2048]{0}', space=vmem, size = 0x800, scoped, tag = 'input window, operand 0, single buffered']
    #allocation3 [shape = 's32[1]{0}', space=sflag, size = 0x4, scoped, tag = 'scoped memory for tpu_custom_call.1']
    #allocation4 [shape = 's32[1]{0}', space=sflag, size = 0x4, scoped, tag = 'scoped memory for tpu_custom_call.1']
    #allocation5 [shape = 'u8[2048]{0}', space=vmem, size = 0x800, scoped, tag = 'output window, operand 0, single buffered']
    %7 = vsyncpa [#allocation3], 0
    %8 = vsyncpa [#allocation4], 0
    // Predicated region
    $region2: #{tpu_custom_call.1} parent=1 // pred_check
      _
    $region3: #{tpu_custom_call.1} parent=1 // pred_check_branch
      %10 = sbr.rel (0) target = $region5
    $region4: #{tpu_custom_call.1} parent=1 // pred_region
      %s12 = ssub.s32 64, 64
      %13 = vsyncadd [#allocation3], %s12
      %s15 = sshll.u32 [#allocation2], 4
      %s16 = int_to_ptr.vmem [resolvable:$true] %s15
      %18 = dma.hbm_to_vmem [thread:$0]  %s0, 64, %s16, [#allocation3]
    $region5: #{tpu_custom_call.1} parent=1 // pred_fallthru
      _
    // Predicated region
    $region6: #{tpu_custom_call.1} parent=1 // pred_check
      _
    $region7: #{tpu_custom_call.1} parent=1 // pred_check_branch
      %20 = sbr.rel (0) target = $region9
    $region8: #{tpu_custom_call.1} parent=1 // pred_region
      _
    $region9: #{tpu_custom_call.1} parent=1 // pred_fallthru
      _
    // Predicated region
    $region10: #{tpu_custom_call.1} parent=1 // pred_check
      _
    $region11: #{tpu_custom_call.1} parent=1 // pred_check_branch
      %22 = sbr.rel (0) target = $region13
    $region12: #{tpu_custom_call.1} parent=1 // pred_region
      %23 = dma.done [#allocation3], 64
    $region13: #{tpu_custom_call.1} parent=1 // pred_fallthru
      _
    %v24 = vld [vmem:[#allocation2] sm:$0xf]
    %v25 = vld [vmem:[%s1] sm:$0x1]
    %v26 = vld [vmem:[%s1 + $0x1] sm:$0x1]
    %28 = vset.pattern.permute.xlu0 0
    %29 = vperm.xlu0 %28, %v24
    %v30 = vpop.permute.xlu0 %29
    %v32 = vlaneseq
    %v33 = vshrl.u32 %v32, 7
    %v34 = vsub.s32 0, %v33
    %v35 = vrot.slane %v25, %v34
    %v36 = vmul.f32 %v30, %v35
    %v37 = vlaneseq
    %v38 = vshrl.u32 %v37, 7
    %v39 = vsub.s32 0, %v38
    %v40 = vrot.slane %v26, %v39
    %v41 = vadd.f32 %v36, %v40
    %vm42 = vcmask 257024
    %43 = vst.msk [vmem:[#allocation5] sm:$0xf] %vm42, %v41
    %44 = vset.pattern.permute.xlu0 1
    %45 = vperm.xlu0 %44, %v24
    %v46 = vpop.permute.xlu0 %45
    %v48 = vmul.f32 %v46, %v35
    %v49 = vadd.f32 %v48, %v40
    %51 = vrot.lane.b32.xlu0 %v49, 32
    %v52 = vpop.permute.xlu0 %51
    %vm54 = vcmask 519424
    %55 = vst.msk [vmem:[#allocation5] sm:$0xf] %vm54, %v52
    %56 = vset.pattern.permute.xlu0 2
    %57 = vperm.xlu0 %56, %v24
    %v58 = vpop.permute.xlu0 %57
    %v60 = vmul.f32 %v58, %v35
    %v61 = vadd.f32 %v60, %v40
    %63 = vrot.lane.b32.xlu0 %v61, 64
    %v64 = vpop.permute.xlu0 %63
    %vm66 = vcmask 781824
    %67 = vst.msk [vmem:[#allocation5] sm:$0xf] %vm66, %v64
    %68 = vset.pattern.permute.xlu0 3
    %69 = vperm.xlu0 %68, %v24
    %v70 = vpop.permute.xlu0 %69
    %v72 = vmul.f32 %v70, %v35
    %v73 = vadd.f32 %v72, %v40
    %75 = vrot.lane.b32.xlu0 %v73, 96
    %v76 = vpop.permute.xlu0 %75
    %vm78 = vcmask 1044224
    %79 = vst.msk [vmem:[#allocation5] sm:$0xf] %vm78, %v76
    // Predicated region
    $region14: #{tpu_custom_call.1} parent=1 // pred_check
      _
    $region15: #{tpu_custom_call.1} parent=1 // pred_check_branch
      %81 = sbr.rel (0) target = $region17
    $region16: #{tpu_custom_call.1} parent=1 // pred_region
      %s83 = ssub.s32 64, 64
      %84 = vsyncadd [#allocation4], %s83
      %s86 = sshll.u32 [#allocation5], 4
      %s87 = int_to_ptr.vmem [resolvable:$true] %s86
      %89 = dma.vmem_to_hbm [thread:$0]  %s87, 64, %s2, [#allocation4]
    $region17: #{tpu_custom_call.1} parent=1 // pred_fallthru
      _
    // Predicated region
    $region18: #{tpu_custom_call.1} parent=1 // pred_check
      _
    $region19: #{tpu_custom_call.1} parent=1 // pred_check_branch
      %91 = sbr.rel (0) target = $region21
    $region20: #{tpu_custom_call.1} parent=1 // pred_region
      %92 = dma.done [#allocation4], 64
    $region21: #{tpu_custom_call.1} parent=1 // pred_fallthru
      _
    %93 = vsyncpa [#allocation3], 1
    %94 = vsyncpa [#allocation4], 1

</llo_original>
